<compile_context>
chip_gen: v7x
topology: tpu7x:2x2x1
jax: 0.10.0
libtpu: 0.0.40
codegen_flags: <defaults>
</compile_context>

<pallas_src>
import functools

import jax
import jax.numpy as jnp
from jax.experimental import pallas as pl
from jax.experimental.pallas import tpu as pltpu


# ----------------------------------------------------------------------------
# Fused Pallas kernel: grid = (row_tiles, layers), M resident in VMEM per tile
# ----------------------------------------------------------------------------
def _fused_cross_layers_kernel(
    m0_ref,    # (TM, M_dim)        input dtype, read at l == 0
    kT_ref,    # (heads, dh, nX)    bf16, shared across layers
    v_ref,     # (heads, nX, dh)    bf16, shared across layers
    wq_ref,    # (heads, M_dim, dh) bf16, layer l (1/sqrt(dh) folded in)
    wo_ref,    # (heads, dh, M_dim) bf16, layer l
    bo_ref,    # (1, M_dim)         f32,  layer l
    o_ref,     # (TM, M_dim)        output dtype, written at l == L-1
    m_sc,      # VMEM (TM, M_dim)   f32 resident accumulator
    *, heads,
):
    l = pl.program_id(1)
    last = pl.num_programs(1) - 1

    # ---- one-time init of the resident M accumulator for this row tile ------
    @pl.when(l == 0)
    def _init():
        m_sc[...] = m0_ref[...].astype(jnp.float32)

    m_f32 = m_sc[...]                                 # (TM, M_dim) f32
    m_bf = m_f32.astype(jnp.bfloat16)

    # ---- per-layer cross-attention -------------------------------------------
    # Static loop over heads: 2-D bf16 MXU matmuls with f32 accumulation; the
    # head-sum of the output projection is fused into `out` (no broadcast of M
    # over heads, no (heads, TM, M_dim) intermediate).
    out = None
    for h in range(heads):
        q = jnp.dot(m_bf, wq_ref[h],
                    preferred_element_type=jnp.float32)                 # (TM, dh)
        s = jnp.dot(q.astype(jnp.bfloat16), kT_ref[h],
                    preferred_element_type=jnp.float32)                 # (TM, nX)
        s = s - jnp.max(s, axis=-1, keepdims=True)                      # stable softmax (f32)
        p = jnp.exp(s)
        p = p * pl.reciprocal(jnp.sum(p, axis=-1, keepdims=True), approx=True)
        a = jnp.dot(p.astype(jnp.bfloat16), v_ref[h],
                    preferred_element_type=jnp.float32)                 # (TM, dh)
        o_h = jnp.dot(a.astype(jnp.bfloat16), wo_ref[h],
                      preferred_element_type=jnp.float32)               # (TM, M_dim)
        out = o_h if out is None else out + o_h
    out = out + bo_ref[...]                                             # f32 bias

    # residual + LayerNorm (eps=1e-5, no affine); one-pass variance, rsqrt on EUP
    res = out + m_f32
    mean = jnp.mean(res, axis=-1, keepdims=True)
    mean_sq = jnp.mean(res * res, axis=-1, keepdims=True)
    var = mean_sq - mean * mean
    m_sc[...] = (res - mean) * jax.lax.rsqrt(var + 1e-5)

    # ---- single HBM writeback per row tile -----------------------------------
    @pl.when(l == last)
    def _store():
        o_ref[...] = m_sc[...].astype(o_ref.dtype)


# ----------------------------------------------------------------------------
# Parameter prep (hoisted: call ONCE at model-build time, not per forward)
# ----------------------------------------------------------------------------
def prepare_kernel_params(params):
    heads = params["heads"]
    dh = params["dim_heads"]
    scale = float(dh) ** -0.5

    def split_heads_cols(w):                  # (rows, inner) -> (heads, rows, dh)
        return w.reshape(w.shape[0], heads, dh).transpose(1, 0, 2)

    # NOTE: for production, choose dh / M_dim as multiples of 128 (ideally 256
    # on v6e/v7x) so every matmul / store is lane-dense.
    wq3 = jnp.stack(
        [split_heads_cols(lp["wq_t"] * scale) for lp in params["layers"]], 0
    ).astype(jnp.bfloat16)                     # (L, h, M_dim, dh), scale folded
    wo3 = jnp.stack(
        [lp["wo_t"].reshape(heads, dh, -1) for lp in params["layers"]], 0
    ).astype(jnp.bfloat16)                     # (L, h, dh, M_dim)
    bo = jnp.stack([lp["bo"] for lp in params["layers"]], 0).astype(jnp.float32)

    return dict(heads=heads, dim_heads=dh,
                wkv_t=params["wkv_t"], bkv=params["bkv"],
                wq3=wq3, wo3=wo3, bo=bo)


# ----------------------------------------------------------------------------
# Wrapper helpers
# ----------------------------------------------------------------------------
def _precompute_kv(X, wkv_t, bkv, heads, dh):
    # Shared to_kv projection computed once per call in plain XLA (so X / Wkv
    # are never resident in kernel VMEM); K pre-transposed per head for q @ k^T.
    inner = heads * dh
    kv = X.astype(jnp.float32) @ wkv_t.astype(jnp.float32) + bkv[0].astype(jnp.float32)
    k = kv[:, :inner].reshape(-1, heads, dh).transpose(1, 0, 2)      # (h, nX, dh)
    v = kv[:, inner:].reshape(-1, heads, dh).transpose(1, 0, 2)      # (h, nX, dh)
    kT = jnp.swapaxes(k, 1, 2)                                        # (h, dh, nX)
    return kT.astype(jnp.bfloat16), v.astype(jnp.bfloat16)


def _pick_row_tile(n_m):
    if n_m <= 256:
        return n_m
    for t in (512, 256, 128, 64, 32, 16, 8):
        if n_m % t == 0:
            return t
    return n_m


def _vmem_limit_bytes(tm, m_dim, n_x, heads, dh):
    bf16, f32 = 2, 4
    kv = 2 * heads * n_x * dh * bf16                      # K^T + V (constant index)
    wts = 2 * heads * m_dim * dh * bf16 + m_dim * f32     # Wq + Wo + bo per layer
    io = 2 * tm * m_dim * f32                             # M0 tile + output tile
    scratch = tm * m_dim * f32
    inter = 4 * tm * max(n_x, m_dim) * f32                # live s/p/attn intermediates
    est = 2 * (kv + wts + io) + scratch + inter           # 2x: double buffering
    limit = max(32 << 20, 2 * est + (8 << 20))
    try:
        cap = int(pltpu.get_tpu_info().vmem_capacity_bytes) * 7 // 8
    except Exception:
        cap = 56 << 20                                    # safe on v7x's 64 MiB VMEM
    return min(limit, cap)


# ----------------------------------------------------------------------------
# Forward: one pallas_call over (row_tiles, layers)
# ----------------------------------------------------------------------------
def m_cross_layers_forward(M, X, kernel_params):
    heads = kernel_params["heads"]
    dh = kernel_params["dim_heads"]
    wq3, wo3, bo = kernel_params["wq3"], kernel_params["wo3"], kernel_params["bo"]
    L = wq3.shape[0]

    n_m, m_dim = M.shape
    n_x = X.shape[0]
    tm = _pick_row_tile(n_m)
    n_tiles = n_m // tm

    kT, v = _precompute_kv(X, kernel_params["wkv_t"], kernel_params["bkv"], heads, dh)

    kernel = functools.partial(_fused_cross_layers_kernel, heads=heads)

    grid_spec = pltpu.PrefetchScalarGridSpec(
        num_scalar_prefetch=0,
        grid=(n_tiles, L),                                   # layer axis innermost
        in_specs=[
            pl.BlockSpec((tm, m_dim), lambda i, l: (i, 0)),                     # M0 tile
            pl.BlockSpec((heads, dh, n_x), lambda i, l: (0, 0, 0)),             # K^T (bf16)
            pl.BlockSpec((heads, n_x, dh), lambda i, l: (0, 0, 0)),             # V   (bf16)
            pl.BlockSpec((None, heads, m_dim, dh), lambda i, l: (l, 0, 0, 0)),  # Wq[l]
            pl.BlockSpec((None, heads, dh, m_dim), lambda i, l: (l, 0, 0, 0)),  # Wo[l]
            pl.BlockSpec((None, 1, m_dim), lambda i, l: (l, 0, 0)),             # bo[l]
        ],
        out_specs=pl.BlockSpec((tm, m_dim), lambda i, l: (i, 0)),
        scratch_shapes=[pltpu.VMEM((tm, m_dim), jnp.float32)],   # resident M per tile
    )

    # NOTE: callers that jit this forward and donate M can additionally pass
    # input_output_aliases={0: 0} to reuse M's HBM buffer for the output.
    return pl.pallas_call(
        kernel,
        out_shape=jax.ShapeDtypeStruct((n_m, m_dim), M.dtype),
        grid_spec=grid_spec,
        compiler_params=pltpu.CompilerParams(
            dimension_semantics=("parallel", "arbitrary"),
            vmem_limit_bytes=_vmem_limit_bytes(tm, m_dim, n_x, heads, dh),
        ),
    )(M, kT, v, wq3, wo3, bo)


# ----------------------------------------------------------------------------
# Deterministic parameter init (PyTorch nn.Linear-style uniform bounds)
# ----------------------------------------------------------------------------
def _linear_params(key, in_dim, out_dim, bias=True):
    kw, kb = jax.random.split(key)
    bound = 1.0 / (in_dim ** 0.5)
    w = jax.random.uniform(kw, (out_dim, in_dim), jnp.float32, -bound, bound)
    b = (jax.random.uniform(kb, (1, out_dim), jnp.float32, -bound, bound)
         if bias else jnp.zeros((1, out_dim), jnp.float32))
    return w, b


def init_params(key, num_layers, M_dim, X_dim, heads, dim_heads):
    inner = heads * dim_heads
    keys = jax.random.split(key, num_layers + 1)
    wkv, bkv = _linear_params(keys[0], X_dim, 2 * inner, bias=True)
    layers = []
    for i in range(num_layers):
        kq, ko = jax.random.split(keys[i + 1])
        wq, _ = _linear_params(kq, M_dim, inner, bias=False)   # to_q, no bias
        wo, bo = _linear_params(ko, inner, M_dim, bias=True)   # output projection
        layers.append(dict(wq_t=wq.T, wo_t=wo.T, bo=bo))
    return dict(heads=heads, dim_heads=dim_heads,
                wkv_t=wkv.T, bkv=bkv, layers=layers)


# ----------------------------------------------------------------------------
# Pure-JAX f32 reference (mirrors the PyTorch forward) for a correctness check
# ----------------------------------------------------------------------------
def reference_forward(M, X, params):
    heads, dh = params["heads"], params["dim_heads"]
    inner = heads * dh
    kv = X @ params["wkv_t"] + params["bkv"][0]
    K, V = kv[:, :inner], kv[:, inner:]
    for lp in params["layers"]:
        q = M @ lp["wq_t"]
        outs = []
        for h in range(heads):
            sl = slice(h * dh, (h + 1) * dh)
            s = (q[:, sl] @ K[:, sl].T) * (dh ** -0.5)
            p = jax.nn.softmax(s, axis=-1)
            outs.append(p @ V[:, sl])
        out = jnp.concatenate(outs, -1) @ lp["wo_t"] + lp["bo"][0]
        res = out + M
        mean = jnp.mean(res, -1, keepdims=True)
        var = jnp.mean((res - mean) ** 2, -1, keepdims=True)
        M = (res - mean) * jax.lax.rsqrt(var + 1e-5)
    return M


# ----------------------------------------------------------------------------
if __name__ == "__main__":
    num_layers = 2
    M_dim = 32
    X_dim = 32
    heads = 2
    dim_heads = 16
    n_M, n_X = 8, 16

    root = jax.random.PRNGKey(0)
    k_m, k_x, k_p = jax.random.split(root, 3)
    M0 = jax.random.normal(k_m, (n_M, M_dim), jnp.float32)
    X = jax.random.normal(k_x, (n_X, X_dim), jnp.float32)
    params = init_params(k_p, num_layers, M_dim, X_dim, heads, dim_heads)

    # Parameter prep hoisted out of the per-call path (done once).
    kp = prepare_kernel_params(params)

    out = m_cross_layers_forward(M0, X, kp)
    out = jax.block_until_ready(out)

    ref = reference_forward(M0, X, params)
    assert out.shape == (n_M, M_dim)
    # tolerance accounts for bf16 MXU operands + pl.reciprocal(approx=True);
    # softmax stats / residual / LayerNorm are kept in f32.
    assert jnp.allclose(out, ref, atol=2e-2, rtol=2e-2), "mismatch vs reference"

    print("KERNEL_OK")
</pallas_src>

<mosaic_0001>
module attributes {stable_mosaic.version = 11 : i64} {
  func.func @_fused_cross_layers_kernel(%arg0: i32, %arg1: i32, %arg2: memref<8x32xf32, #tpu.memory_space<vmem>>, %arg3: memref<2x16x16xbf16, #tpu.memory_space<vmem>>, %arg4: memref<2x16x16xbf16, #tpu.memory_space<vmem>>, %arg5: memref<1x2x32x16xbf16, #tpu.memory_space<vmem>>, %arg6: memref<1x2x16x32xbf16, #tpu.memory_space<vmem>>, %arg7: memref<1x1x32xf32, #tpu.memory_space<vmem>>, %arg8: memref<8x32xf32, #tpu.memory_space<vmem>>, %arg9: memref<8x32xf32, #tpu.memory_space<vmem>>) attributes {dimension_semantics = [#tpu.dimension_semantics<parallel>, #tpu.dimension_semantics<arbitrary>], iteration_bounds = array<i64: 1, 2>, scalar_prefetch = 0 : i64, scratch_operands = 1 : i64, tpu.core_type = #tpu.core_type<tc>, window_params = [{transform_indices = @transform_0, window_bounds = array<i64: 8, 32>}, {pipeline_mode = #tpu.pipeline_mode<synchronous>, transform_indices = @transform_1, window_bounds = array<i64: 2, 16, 16>}, {pipeline_mode = #tpu.pipeline_mode<synchronous>, transform_indices = @transform_2, window_bounds = array<i64: 2, 16, 16>}, {transform_indices = @transform_3, window_bounds = array<i64: 1, 2, 32, 16>}, {transform_indices = @transform_4, window_bounds = array<i64: 1, 2, 16, 32>}, {transform_indices = @transform_5, window_bounds = array<i64: 1, 1, 32>}, {transform_indices = @transform_6, window_bounds = array<i64: 8, 32>}]} {
    %c0_i32 = arith.constant 0 : i32
    %0 = arith.cmpi eq, %arg1, %c0_i32 : i32
    %1 = arith.extui %0 : i1 to i32
    %c0_i32_0 = arith.constant 0 : i32
    %2 = arith.cmpi ne, %1, %c0_i32_0 : i32
    scf.if %2 {
      %c0_51 = arith.constant 0 : index
      %c0_52 = arith.constant 0 : index
      %83 = vector.load %arg2[%c0_51, %c0_52] : memref<8x32xf32, #tpu.memory_space<vmem>>, vector<8x32xf32>
      %c0_53 = arith.constant 0 : index
      %c0_54 = arith.constant 0 : index
      %84 = vector.load %arg9[%c0_53, %c0_54] : memref<8x32xf32, #tpu.memory_space<vmem>>, vector<8x32xf32>
      tpu.vector_store %arg9[%c0_53, %c0_54], %83 {strides = array<i32>} : memref<8x32xf32, #tpu.memory_space<vmem>>, vector<8x32xf32>,
    } else {
    }
    %c0 = arith.constant 0 : index
    %c0_1 = arith.constant 0 : index
    %3 = vector.load %arg9[%c0, %c0_1] : memref<8x32xf32, #tpu.memory_space<vmem>>, vector<8x32xf32>
    %4 = arith.truncf %3 : vector<8x32xf32> to vector<8x32xbf16>
    %c0_2 = arith.constant 0 : index
    %c0_3 = arith.constant 0 : index
    %c0_4 = arith.constant 0 : index
    %c0_5 = arith.constant 0 : index
    %5 = vector.load %arg5[%c0_2, %c0_3, %c0_4, %c0_5] : memref<1x2x32x16xbf16, #tpu.memory_space<vmem>>, vector<1x1x32x16xbf16>
    %6 = vector.shape_cast %5 : vector<1x1x32x16xbf16> to vector<32x16xbf16>
    %cst = arith.constant dense<0.000000e+00> : vector<8x16xf32>
    %7 = tpu.matmul %4, %6, %cst {dimension_numbers = #tpu.dot_dimension_numbers<[1], [0], [0], [1], [0, 0, 1, 1], [], []>} : vector<8x32xbf16>, vector<32x16xbf16>, vector<8x16xf32> -> vector<8x16xf32>
    %8 = arith.truncf %7 : vector<8x16xf32> to vector<8x16xbf16>
    %c0_6 = arith.constant 0 : index
    %c0_7 = arith.constant 0 : index
    %c0_8 = arith.constant 0 : index
    %9 = vector.load %arg3[%c0_6, %c0_7, %c0_8] : memref<2x16x16xbf16, #tpu.memory_space<vmem>>, vector<1x16x16xbf16>
    %10 = vector.shape_cast %9 : vector<1x16x16xbf16> to vector<16x16xbf16>
    %cst_9 = arith.constant dense<0.000000e+00> : vector<8x16xf32>
    %11 = tpu.matmul %8, %10, %cst_9 {dimension_numbers = #tpu.dot_dimension_numbers<[1], [0], [0], [1], [0, 0, 1, 1], [], []>} : vector<8x16xbf16>, vector<16x16xbf16>, vector<8x16xf32> -> vector<8x16xf32>
    %cst_10 = arith.constant dense<0xFF800000> : vector<8xf32>
    %12 = vector.multi_reduction <maximumf>, %11, %cst_10 [1] : vector<8x16xf32> to vector<8xf32>
    %13 = vector.shape_cast %12 : vector<8xf32> to vector<8x1xf32>
    %14 = vector.broadcast %13 : vector<8x1xf32> to vector<8x16xf32>
    %15 = arith.subf %11, %14 : vector<8x16xf32>
    %16 = math.exp %15 : vector<8x16xf32>
    %cst_11 = arith.constant dense<0.000000e+00> : vector<8xf32>
    %17 = vector.multi_reduction <add>, %16, %cst_11 [1] : vector<8x16xf32> to vector<8xf32>
    %18 = vector.shape_cast %17 : vector<8xf32> to vector<8x1xf32>
    %19 = tpu.reciprocal %18 {approx = true} : vector<8x1xf32> -> vector<8x1xf32>
    %20 = vector.broadcast %19 : vector<8x1xf32> to vector<8x16xf32>
    %21 = arith.mulf %16, %20 : vector<8x16xf32>
    %22 = arith.truncf %21 : vector<8x16xf32> to vector<8x16xbf16>
    %c0_12 = arith.constant 0 : index
    %c0_13 = arith.constant 0 : index
    %c0_14 = arith.constant 0 : index
    %23 = vector.load %arg4[%c0_12, %c0_13, %c0_14] : memref<2x16x16xbf16, #tpu.memory_space<vmem>>, vector<1x16x16xbf16>
    %24 = vector.shape_cast %23 : vector<1x16x16xbf16> to vector<16x16xbf16>
    %cst_15 = arith.constant dense<0.000000e+00> : vector<8x16xf32>
    %25 = tpu.matmul %22, %24, %cst_15 {dimension_numbers = #tpu.dot_dimension_numbers<[1], [0], [0], [1], [0, 0, 1, 1], [], []>} : vector<8x16xbf16>, vector<16x16xbf16>, vector<8x16xf32> -> vector<8x16xf32>
    %26 = arith.truncf %25 : vector<8x16xf32> to vector<8x16xbf16>
    %c0_16 = arith.constant 0 : index
    %c0_17 = arith.constant 0 : index
    %c0_18 = arith.constant 0 : index
    %c0_19 = arith.constant 0 : index
    %27 = vector.load %arg6[%c0_16, %c0_17, %c0_18, %c0_19] : memref<1x2x16x32xbf16, #tpu.memory_space<vmem>>, vector<1x1x16x32xbf16>
    %28 = vector.shape_cast %27 : vector<1x1x16x32xbf16> to vector<16x32xbf16>
    %cst_20 = arith.constant dense<0.000000e+00> : vector<8x32xf32>
    %29 = tpu.matmul %26, %28, %cst_20 {dimension_numbers = #tpu.dot_dimension_numbers<[1], [0], [0], [1], [0, 0, 1, 1], [], []>} : vector<8x16xbf16>, vector<16x32xbf16>, vector<8x32xf32> -> vector<8x32xf32>
    %c0_21 = arith.constant 0 : index
    %c1 = arith.constant 1 : index
    %c0_22 = arith.constant 0 : index
    %c0_23 = arith.constant 0 : index
    %30 = vector.load %arg5[%c0_21, %c1, %c0_22, %c0_23] : memref<1x2x32x16xbf16, #tpu.memory_space<vmem>>, vector<1x1x32x16xbf16>
    %31 = vector.shape_cast %30 : vector<1x1x32x16xbf16> to vector<32x16xbf16>
    %cst_24 = arith.constant dense<0.000000e+00> : vector<8x16xf32>
    %32 = tpu.matmul %4, %31, %cst_24 {dimension_numbers = #tpu.dot_dimension_numbers<[1], [0], [0], [1], [0, 0, 1, 1], [], []>} : vector<8x32xbf16>, vector<32x16xbf16>, vector<8x16xf32> -> vector<8x16xf32>
    %33 = arith.truncf %32 : vector<8x16xf32> to vector<8x16xbf16>
    %c1_25 = arith.constant 1 : index
    %c0_26 = arith.constant 0 : index
    %c0_27 = arith.constant 0 : index
    %34 = vector.load %arg3[%c1_25, %c0_26, %c0_27] : memref<2x16x16xbf16, #tpu.memory_space<vmem>>, vector<1x16x16xbf16>
    %35 = vector.shape_cast %34 : vector<1x16x16xbf16> to vector<16x16xbf16>
    %cst_28 = arith.constant dense<0.000000e+00> : vector<8x16xf32>
    %36 = tpu.matmul %33, %35, %cst_28 {dimension_numbers = #tpu.dot_dimension_numbers<[1], [0], [0], [1], [0, 0, 1, 1], [], []>} : vector<8x16xbf16>, vector<16x16xbf16>, vector<8x16xf32> -> vector<8x16xf32>
    %cst_29 = arith.constant dense<0xFF800000> : vector<8xf32>
    %37 = vector.multi_reduction <maximumf>, %36, %cst_29 [1] : vector<8x16xf32> to vector<8xf32>
    %38 = vector.shape_cast %37 : vector<8xf32> to vector<8x1xf32>
    %39 = vector.broadcast %38 : vector<8x1xf32> to vector<8x16xf32>
    %40 = arith.subf %36, %39 : vector<8x16xf32>
    %41 = math.exp %40 : vector<8x16xf32>
    %cst_30 = arith.constant dense<0.000000e+00> : vector<8xf32>
    %42 = vector.multi_reduction <add>, %41, %cst_30 [1] : vector<8x16xf32> to vector<8xf32>
    %43 = vector.shape_cast %42 : vector<8xf32> to vector<8x1xf32>
    %44 = tpu.reciprocal %43 {approx = true} : vector<8x1xf32> -> vector<8x1xf32>
    %45 = vector.broadcast %44 : vector<8x1xf32> to vector<8x16xf32>
    %46 = arith.mulf %41, %45 : vector<8x16xf32>
    %47 = arith.truncf %46 : vector<8x16xf32> to vector<8x16xbf16>
    %c1_31 = arith.constant 1 : index
    %c0_32 = arith.constant 0 : index
    %c0_33 = arith.constant 0 : index
    %48 = vector.load %arg4[%c1_31, %c0_32, %c0_33] : memref<2x16x16xbf16, #tpu.memory_space<vmem>>, vector<1x16x16xbf16>
    %49 = vector.shape_cast %48 : vector<1x16x16xbf16> to vector<16x16xbf16>
    %cst_34 = arith.constant dense<0.000000e+00> : vector<8x16xf32>
    %50 = tpu.matmul %47, %49, %cst_34 {dimension_numbers = #tpu.dot_dimension_numbers<[1], [0], [0], [1], [0, 0, 1, 1], [], []>} : vector<8x16xbf16>, vector<16x16xbf16>, vector<8x16xf32> -> vector<8x16xf32>
    %51 = arith.truncf %50 : vector<8x16xf32> to vector<8x16xbf16>
    %c0_35 = arith.constant 0 : index
    %c1_36 = arith.constant 1 : index
    %c0_37 = arith.constant 0 : index
    %c0_38 = arith.constant 0 : index
    %52 = vector.load %arg6[%c0_35, %c1_36, %c0_37, %c0_38] : memref<1x2x16x32xbf16, #tpu.memory_space<vmem>>, vector<1x1x16x32xbf16>
    %53 = vector.shape_cast %52 : vector<1x1x16x32xbf16> to vector<16x32xbf16>
    %cst_39 = arith.constant dense<0.000000e+00> : vector<8x32xf32>
    %54 = tpu.matmul %51, %53, %cst_39 {dimension_numbers = #tpu.dot_dimension_numbers<[1], [0], [0], [1], [0, 0, 1, 1], [], []>} : vector<8x16xbf16>, vector<16x32xbf16>, vector<8x32xf32> -> vector<8x32xf32>
    %55 = arith.addf %29, %54 : vector<8x32xf32>
    %c0_40 = arith.constant 0 : index
    %c0_41 = arith.constant 0 : index
    %c0_42 = arith.constant 0 : index
    %56 = vector.load %arg7[%c0_40, %c0_41, %c0_42] : memref<1x1x32xf32, #tpu.memory_space<vmem>>, vector<1x1x32xf32>
    %57 = vector.shape_cast %56 : vector<1x1x32xf32> to vector<1x32xf32>
    %58 = vector.broadcast %57 : vector<1x32xf32> to vector<8x32xf32>
    %59 = arith.addf %55, %58 : vector<8x32xf32>
    %60 = arith.addf %59, %3 : vector<8x32xf32>
    %cst_43 = arith.constant dense<0.000000e+00> : vector<8xf32>
    %61 = vector.multi_reduction <add>, %60, %cst_43 [1] : vector<8x32xf32> to vector<8xf32>
    %62 = vector.shape_cast %61 : vector<8xf32> to vector<8x1xf32>
    %cst_44 = arith.constant 3.200000e+01 : f32
    %63 = vector.broadcast %cst_44 : f32 to vector<8x1xf32>
    %64 = arith.divf %62, %63 : vector<8x1xf32>
    %65 = arith.mulf %60, %60 : vector<8x32xf32>
    %cst_45 = arith.constant dense<0.000000e+00> : vector<8xf32>
    %66 = vector.multi_reduction <add>, %65, %cst_45 [1] : vector<8x32xf32> to vector<8xf32>
    %67 = vector.shape_cast %66 : vector<8xf32> to vector<8x1xf32>
    %cst_46 = arith.constant 3.200000e+01 : f32
    %68 = vector.broadcast %cst_46 : f32 to vector<8x1xf32>
    %69 = arith.divf %67, %68 : vector<8x1xf32>
    %70 = arith.mulf %64, %64 : vector<8x1xf32>
    %71 = arith.subf %69, %70 : vector<8x1xf32>
    %72 = vector.broadcast %64 : vector<8x1xf32> to vector<8x32xf32>
    %73 = arith.subf %60, %72 : vector<8x32xf32>
    %cst_47 = arith.constant 9.99999974E-6 : f32
    %74 = vector.broadcast %cst_47 : f32 to vector<8x1xf32>
    %75 = arith.addf %71, %74 : vector<8x1xf32>
    %76 = math.rsqrt %75 : vector<8x1xf32>
    %77 = vector.broadcast %76 : vector<8x1xf32> to vector<8x32xf32>
    %78 = arith.mulf %73, %77 : vector<8x32xf32>
    %c0_48 = arith.constant 0 : index
    %c0_49 = arith.constant 0 : index
    %79 = vector.load %arg9[%c0_48, %c0_49] : memref<8x32xf32, #tpu.memory_space<vmem>>, vector<8x32xf32>
    tpu.vector_store %arg9[%c0_48, %c0_49], %78 {strides = array<i32>} : memref<8x32xf32, #tpu.memory_space<vmem>>, vector<8x32xf32>,
    %c1_i32 = arith.constant 1 : i32
    %80 = arith.cmpi eq, %arg1, %c1_i32 : i32
    %81 = arith.extui %80 : i1 to i32
    %c0_i32_50 = arith.constant 0 : i32
    %82 = arith.cmpi ne, %81, %c0_i32_50 : i32
    scf.if %82 {
      %c0_51 = arith.constant 0 : index
      %c0_52 = arith.constant 0 : index
      %83 = vector.load %arg9[%c0_51, %c0_52] : memref<8x32xf32, #tpu.memory_space<vmem>>, vector<8x32xf32>
      %c0_53 = arith.constant 0 : index
      %c0_54 = arith.constant 0 : index
      %84 = vector.load %arg8[%c0_53, %c0_54] : memref<8x32xf32, #tpu.memory_space<vmem>>, vector<8x32xf32>
      tpu.vector_store %arg8[%c0_53, %c0_54], %83 {strides = array<i32>} : memref<8x32xf32, #tpu.memory_space<vmem>>, vector<8x32xf32>,
    } else {
    }
    return
  }
  func.func @transform_0(%arg0: i32, %arg1: i32) -> (i32, i32) {
    %c0_i32 = arith.constant 0 : i32
    %c0_i32_0 = arith.constant 0 : i32
    return %arg0, %c0_i32 : i32, i32
  }
  func.func @transform_1(%arg0: i32, %arg1: i32) -> (i32, i32, i32) {
    %c0_i32 = arith.constant 0 : i32
    %c0_i32_0 = arith.constant 0 : i32
    %c0_i32_1 = arith.constant 0 : i32
    %c0_i32_2 = arith.constant 0 : i32
    return %c0_i32, %c0_i32_0, %c0_i32_1 : i32, i32, i32
  }
  func.func @transform_2(%arg0: i32, %arg1: i32) -> (i32, i32, i32) {
    %c0_i32 = arith.constant 0 : i32
    %c0_i32_0 = arith.constant 0 : i32
    %c0_i32_1 = arith.constant 0 : i32
    %c0_i32_2 = arith.constant 0 : i32
    return %c0_i32, %c0_i32_0, %c0_i32_1 : i32, i32, i32
  }
  func.func @transform_3(%arg0: i32, %arg1: i32) -> (i32, i32, i32, i32) {
    %c0_i32 = arith.constant 0 : i32
    %c0_i32_0 = arith.constant 0 : i32
    %c0_i32_1 = arith.constant 0 : i32
    %c0_i32_2 = arith.constant 0 : i32
    return %arg1, %c0_i32, %c0_i32_0, %c0_i32_1 : i32, i32, i32, i32
  }
  func.func @transform_4(%arg0: i32, %arg1: i32) -> (i32, i32, i32, i32) {
    %c0_i32 = arith.constant 0 : i32
    %c0_i32_0 = arith.constant 0 : i32
    %c0_i32_1 = arith.constant 0 : i32
    %c0_i32_2 = arith.constant 0 : i32
    return %arg1, %c0_i32, %c0_i32_0, %c0_i32_1 : i32, i32, i32, i32
  }
  func.func @transform_5(%arg0: i32, %arg1: i32) -> (i32, i32, i32) {
    %c0_i32 = arith.constant 0 : i32
    %c0_i32_0 = arith.constant 0 : i32
    %c0_i32_1 = arith.constant 0 : i32
    return %arg1, %c0_i32, %c0_i32_0 : i32, i32, i32
  }
  func.func @transform_6(%arg0: i32, %arg1: i32) -> (i32, i32) {
    %c0_i32 = arith.constant 0 : i32
    %c0_i32_0 = arith.constant 0 : i32
    return %arg0, %c0_i32 : i32, i32
  }
}

</mosaic_0001>

<llo_original>
// kernel: tpu_custom_call.1
$region0: #{tpu_custom_call.1}
  #allocation0 [shape = 'u32[]', space=smem, size = 0x4, offset = 0x4, fixed_abs, tag = 'smem constant byte address 0x4 - core index']
  #allocation1 [shape = 'u32[144,128]{1,0:T(1,128)}', space=vmem, size = 0x12000, scoped, tag = 'internal scratch']
  #allocation2 [shape = 'f32[8,32]{1,0:T(8,128)}', space=vmem, size = 0x1000, scoped, tag = 'scratch operand']
  %s0 = inlined_call_operand.vmem [shape: f32[8,32], index: 0, kind: input, shape index: {}]
  %s1 = inlined_call_operand.vmem [shape: bf16[2,16,16], index: 1, kind: input, shape index: {}]
  %s2 = inlined_call_operand.vmem [shape: bf16[2,16,16], index: 2, kind: input, shape index: {}]
  %s3 = inlined_call_operand.vmem [shape: bf16[2,2,32,16], index: 3, kind: input, shape index: {}]
  %s4 = inlined_call_operand.vmem [shape: bf16[2,2,16,32], index: 4, kind: input, shape index: {}]
  %s5 = inlined_call_operand.vmem [shape: f32[2,1,32], index: 5, kind: input, shape index: {}]
  %s6 = inlined_call_operand.hbm [shape: f32[8,32], index: 6, kind: output, shape index: {}]
  %s7 = sld [smem:[#allocation0]]
  $region65: #{tpu_custom_call.1} parent=0
    _
  %s9 = ssub.s32 1, %s7
  %s10 = scalar_select 0, %s9, %s7
  $region1: #{tpu_custom_call.1} parent=0
    #allocation3 [shape = 'u8[4096]{0}', space=vmem, size = 0x1000, scoped, tag = 'output window, operand 0, single buffered']
    #allocation4 [shape = 's32[2]{0}', space=sflag, size = 0x8, scoped, tag = 'scoped memory for tpu_custom_call.1']
    %11 = vsyncpa [#allocation4], 0
    loop: start=0, step=1, limit=4
    $region2: #{tpu_custom_call.1} parent=1 // loop_pre_header
      _
    $region3: #{tpu_custom_call.1} parent=1 // loop_header
      %s13 = sphi 0, %s17
      %p14 = scmp.ge.s32.totalorder %s13, 4
      %s20 = sphi 0, %s32
      %s21 = sphi 0, %s28
      %s22 = sphi 0, %s20
      %s23 = sphi 0, %s21
      %s24 = sphi 0, %s22
      %s25 = sphi 0, %s23
      %s35 = sphi 0, %s37
      %s38 = sphi 0, %s35
      %s39 = sphi 0, %s38
      %s55 = sphi 0, %s39
      %s59 = sphi 0, %s59
      %s61 = sphi 0, %s59
      %s62 = sphi 0, %s61
      %s76 = sphi 0, %s62
      %s80 = sphi 0, %s80
      %s82 = sphi 0, %s80
      %s83 = sphi 0, %s82
      %s97 = sphi 0, %s83
      %s103 = sphi 0, %s105
      %s106 = sphi 0, %s103
      %s107 = sphi 0, %s106
      %s123 = sphi 0, %s107
      %s129 = sphi 0, %s131
      %s132 = sphi 0, %s129
      %s133 = sphi 0, %s132
      %s149 = sphi 0, %s133
      %s155 = sphi 0, %s157
      %s158 = sphi 0, %s155
      %s159 = sphi 0, %s158
      %s175 = sphi 0, %s159
      %s181 = sphi 0, %s183
      %s184 = sphi 0, %s181
      %s185 = sphi 0, %s184
      %s201 = sphi 0, %s185
    $region4: #{tpu_custom_call.1} parent=1 // loop_header_branch
      %16 = sbr.rel (%p14) target = $region8
    $region5: #{tpu_custom_call.1} parent=1 // loop_body
      %s18 = ssub.s32 %s13, 1
      %s19 = ssub.s32 %s13, 2
      %s26 = sadd.s32 1, %s21
      %p27 = scmp.ge.s32.totalorder %s26, 2
      %s28 = scalar_select %p27, 0, %s26
      %s29 = sadd.s32 1, %s20
      %s30 = scalar_select %p27, %s29, %s20
      %p31 = scmp.ge.s32.totalorder %s30, 1
      %s32 = scalar_select %p31, 0, %s30
      %s33 = ssub.s32 %s20, %s32
      %p34 = scmp.eq.s32.totalorder %s33, 0
      %s36 = sadd.s32 %s35, 1
      %s37 = scalar_select %p34, %s35, %s36
      %p40 = pneg %p34
      %p41 = scmp.eq.s32.totalorder %s13, 1
      %p42 = por %p40, %p41
      %p43 = scmp.ne.s32.totalorder %s35, %s38
      %p44 = scmp.eq.s32.totalorder %s13, 0
      %p45 = por %p43, %p44
      %p46 = scmp.ne.s32.totalorder %s35, %s38
      %p47 = scmp.eq.s32.totalorder %s18, 1
      %p48 = por %p46, %p47
      %p49 = scmp.ne.s32.totalorder %s38, %s39
      %p50 = scmp.eq.s32.totalorder %s18, 0
      %p51 = por %p49, %p50
      %p52 = scmp.ne.s32.totalorder %s38, %s39
      %p53 = scmp.eq.s32.totalorder %s19, 1
      %p54 = por %p52, %p53
      %p56 = scmp.ne.s32.totalorder %s39, %s55
      %p57 = scmp.eq.s32.totalorder %s19, 0
      %p58 = por %p56, %p57
      %s60 = sadd.s32 %s59, 1
      %p63 = scmp.eq.s32.totalorder %s13, 1
      %p64 = scmp.ne.s32.totalorder %s59, %s61
      %p65 = scmp.eq.s32.totalorder %s13, 0
      %p66 = por %p64, %p65
      %p67 = scmp.ne.s32.totalorder %s59, %s61
      %p68 = scmp.eq.s32.totalorder %s18, 1
      %p69 = por %p67, %p68
      %p70 = scmp.ne.s32.totalorder %s61, %s62
      %p71 = scmp.eq.s32.totalorder %s18, 0
      %p72 = por %p70, %p71
      %p73 = scmp.ne.s32.totalorder %s61, %s62
      %p74 = scmp.eq.s32.totalorder %s19, 1
      %p75 = por %p73, %p74
      %p77 = scmp.ne.s32.totalorder %s62, %s76
      %p78 = scmp.eq.s32.totalorder %s19, 0
      %p79 = por %p77, %p78
      %s81 = sadd.s32 %s80, 1
      %p84 = scmp.eq.s32.totalorder %s13, 1
      %p85 = scmp.ne.s32.totalorder %s80, %s82
      %p86 = scmp.eq.s32.totalorder %s13, 0
      %p87 = por %p85, %p86
      %p88 = scmp.ne.s32.totalorder %s80, %s82
      %p89 = scmp.eq.s32.totalorder %s18, 1
      %p90 = por %p88, %p89
      %p91 = scmp.ne.s32.totalorder %s82, %s83
      %p92 = scmp.eq.s32.totalorder %s18, 0
      %p93 = por %p91, %p92
      %p94 = scmp.ne.s32.totalorder %s82, %s83
      %p95 = scmp.eq.s32.totalorder %s19, 1
      %p96 = por %p94, %p95
      %p98 = scmp.ne.s32.totalorder %s83, %s97
      %p99 = scmp.eq.s32.totalorder %s19, 0
      %p100 = por %p98, %p99
      %s101 = ssub.s32 %s21, %s28
      %p102 = scmp.eq.s32.totalorder %s101, 0
      %s104 = sadd.s32 %s103, 1
      %s105 = scalar_select %p102, %s103, %s104
      %p108 = pneg %p102
      %p109 = scmp.eq.s32.totalorder %s13, 1
      %p110 = por %p108, %p109
      %p111 = scmp.ne.s32.totalorder %s103, %s106
      %p112 = scmp.eq.s32.totalorder %s13, 0
      %p113 = por %p111, %p112
      %p114 = scmp.ne.s32.totalorder %s103, %s106
      %p115 = scmp.eq.s32.totalorder %s18, 1
      %p116 = por %p114, %p115
      %p117 = scmp.ne.s32.totalorder %s106, %s107
      %p118 = scmp.eq.s32.totalorder %s18, 0
      %p119 = por %p117, %p118
      %p120 = scmp.ne.s32.totalorder %s106, %s107
      %p121 = scmp.eq.s32.totalorder %s19, 1
      %p122 = por %p120, %p121
      %p124 = scmp.ne.s32.totalorder %s107, %s123
      %p125 = scmp.eq.s32.totalorder %s19, 0
      %p126 = por %p124, %p125
      %s127 = ssub.s32 %s21, %s28
      %p128 = scmp.eq.s32.totalorder %s127, 0
      %s130 = sadd.s32 %s129, 1
      %s131 = scalar_select %p128, %s129, %s130
      %p134 = pneg %p128
      %p135 = scmp.eq.s32.totalorder %s13, 1
      %p136 = por %p134, %p135
      %p137 = scmp.ne.s32.totalorder %s129, %s132
      %p138 = scmp.eq.s32.totalorder %s13, 0
      %p139 = por %p137, %p138
      %p140 = scmp.ne.s32.totalorder %s129, %s132
      %p141 = scmp.eq.s32.totalorder %s18, 1
      %p142 = por %p140, %p141
      %p143 = scmp.ne.s32.totalorder %s132, %s133
      %p144 = scmp.eq.s32.totalorder %s18, 0
      %p145 = por %p143, %p144
      %p146 = scmp.ne.s32.totalorder %s132, %s133
      %p147 = scmp.eq.s32.totalorder %s19, 1
      %p148 = por %p146, %p147
      %p150 = scmp.ne.s32.totalorder %s133, %s149
      %p151 = scmp.eq.s32.totalorder %s19, 0
      %p152 = por %p150, %p151
      %s153 = ssub.s32 %s21, %s28
      %p154 = scmp.eq.s32.totalorder %s153, 0
      %s156 = sadd.s32 %s155, 1
      %s157 = scalar_select %p154, %s155, %s156
      %p160 = pneg %p154
      %p161 = scmp.eq.s32.totalorder %s13, 1
      %p162 = por %p160, %p161
      %p163 = scmp.ne.s32.totalorder %s155, %s158
      %p164 = scmp.eq.s32.totalorder %s13, 0
      %p165 = por %p163, %p164
      %p166 = scmp.ne.s32.totalorder %s155, %s158
      %p167 = scmp.eq.s32.totalorder %s18, 1
      %p168 = por %p166, %p167
      %p169 = scmp.ne.s32.totalorder %s158, %s159
      %p170 = scmp.eq.s32.totalorder %s18, 0
      %p171 = por %p169, %p170
      %p172 = scmp.ne.s32.totalorder %s158, %s159
      %p173 = scmp.eq.s32.totalorder %s19, 1
      %p174 = por %p172, %p173
      %p176 = scmp.ne.s32.totalorder %s159, %s175
      %p177 = scmp.eq.s32.totalorder %s19, 0
      %p178 = por %p176, %p177
      %s179 = ssub.s32 %s20, %s32
      %p180 = scmp.eq.s32.totalorder %s179, 0
      %s182 = sadd.s32 %s181, 1
      %s183 = scalar_select %p180, %s181, %s182
      %p186 = pneg %p180
      %p187 = scmp.eq.s32.totalorder %s13, 1
      %p188 = por %p186, %p187
      %p189 = scmp.ne.s32.totalorder %s181, %s184
      %p190 = scmp.eq.s32.totalorder %s13, 0
      %p191 = por %p189, %p190
      %p192 = scmp.ne.s32.totalorder %s181, %s184
      %p193 = scmp.eq.s32.totalorder %s18, 1
      %p194 = por %p192, %p193
      %p195 = scmp.ne.s32.totalorder %s184, %s185
      %p196 = scmp.eq.s32.totalorder %s18, 0
      %p197 = por %p195, %p196
      %p198 = scmp.ne.s32.totalorder %s184, %s185
      %p199 = scmp.eq.s32.totalorder %s19, 1
      %p200 = por %p198, %p199
      %p202 = scmp.ne.s32.totalorder %s185, %s201
      %p203 = scmp.eq.s32.totalorder %s19, 0
      %p204 = por %p202, %p203
      %p205 = scmp.le.s32.totalorder 1, %s13
      %p206 = scmp.lt.s32.totalorder %s13, 3
      %p207 = pnand %p205, %p206
      %p208 = pneg %p207
      // Predicated region
      $region9: #{tpu_custom_call.1} parent=5 // pred_check
        _
      $region10: #{tpu_custom_call.1} parent=5 // pred_check_branch
        %210 = sbr.rel (%p207) target = $region12
      $region11: #{tpu_custom_call.1} parent=5 // pred_region
        %s211 = ssub.s32 %s13, 1
        // Predicated region
        $region13: #{tpu_custom_call.1} parent=11 // pred_check
          %p212 = pneg %p51
        $region14: #{tpu_custom_call.1} parent=11 // pred_check_branch
          %214 = sbr.rel (%p212) target = $region16
        $region15: #{tpu_custom_call.1} parent=11 // pred_region
          %p215 = scmp.lt.s32.totalorder %s22, 0
          %s216 = scalar_select %p215, %s22, 0
          %s217 = smul.addr %s216, 8
          %s218 = scalar_lea.vmem %s0, %s217
        $region16: #{tpu_custom_call.1} parent=11 // pred_fallthru
          _
        // Predicated region
        $region17: #{tpu_custom_call.1} parent=11 // pred_check
          %p219 = pneg %p72
        $region18: #{tpu_custom_call.1} parent=11 // pred_check_branch
          %221 = sbr.rel (%p219) target = $region20
        $region19: #{tpu_custom_call.1} parent=11 // pred_region
          _
        $region20: #{tpu_custom_call.1} parent=11 // pred_fallthru
          _
        // Predicated region
        $region21: #{tpu_custom_call.1} parent=11 // pred_check
          %p222 = pneg %p93
        $region22: #{tpu_custom_call.1} parent=11 // pred_check_branch
          %224 = sbr.rel (%p222) target = $region24
        $region23: #{tpu_custom_call.1} parent=11 // pred_region
          _
        $region24: #{tpu_custom_call.1} parent=11 // pred_fallthru
          _
      $region12: #{tpu_custom_call.1} parent=5 // pred_fallthru
        _
      %p225 = scmp.lt.s32.totalorder %s13, 2
      // Predicated region
      $region25: #{tpu_custom_call.1} parent=5 // pred_check
        %p226 = pneg %p225
      $region26: #{tpu_custom_call.1} parent=5 // pred_check_branch
        %228 = sbr.rel (%p226) target = $region28
      $region27: #{tpu_custom_call.1} parent=5 // pred_region
        // Predicated region
        $region29: #{tpu_custom_call.1} parent=27 // pred_check
          %p229 = pneg %p113
        $region30: #{tpu_custom_call.1} parent=27 // pred_check_branch
          %231 = sbr.rel (%p229) target = $region32
        $region31: #{tpu_custom_call.1} parent=27 // pred_region
          %p232 = scmp.lt.s32.totalorder %s21, 1
          %s233 = scalar_select %p232, %s21, 1
          %s234 = smul.addr %s233, 8
          %s235 = smul.addr %s234, 4
          %s236 = scalar_lea.vmem %s3, %s235
        $region32: #{tpu_custom_call.1} parent=27 // pred_fallthru
          _
        // Predicated region
        $region33: #{tpu_custom_call.1} parent=27 // pred_check
          %p237 = pneg %p139
        $region34: #{tpu_custom_call.1} parent=27 // pred_check_branch
          %239 = sbr.rel (%p237) target = $region36
        $region35: #{tpu_custom_call.1} parent=27 // pred_region
          %p240 = scmp.lt.s32.totalorder %s21, 1
          %s241 = scalar_select %p240, %s21, 1
          %s242 = smul.addr %s241, 4
          %s243 = smul.addr %s242, 4
          %s244 = scalar_lea.vmem %s4, %s243
        $region36: #{tpu_custom_call.1} parent=27 // pred_fallthru
          _
        // Predicated region
        $region37: #{tpu_custom_call.1} parent=27 // pred_check
          %p245 = pneg %p165
        $region38: #{tpu_custom_call.1} parent=27 // pred_check_branch
          %247 = sbr.rel (%p245) target = $region40
        $region39: #{tpu_custom_call.1} parent=27 // pred_region
          %p248 = scmp.lt.s32.totalorder %s21, 1
          %s249 = scalar_select %p248, %s21, 1
          %s250 = scalar_lea.vmem %s5, %s249
        $region40: #{tpu_custom_call.1} parent=27 // pred_fallthru
          _
      $region28: #{tpu_custom_call.1} parent=5 // pred_fallthru
        _
      %p251 = scmp.le.s32.totalorder 1, %s13
      %p252 = scmp.lt.s32.totalorder %s13, 3
      %p253 = pnand %p251, %p252
      %p254 = pneg %p253
      // Predicated region
      $region41: #{tpu_custom_call.1} parent=5 // pred_check
        _
      $region42: #{tpu_custom_call.1} parent=5 // pred_check_branch
        %256 = sbr.rel (%p253) target = $region44
      $region43: #{tpu_custom_call.1} parent=5 // pred_region
        %s257 = ssub.s32 %s13, 1
        %p258 = scmp.lt.s32.totalorder %s22, 0
        %s259 = scalar_select %p258, %s22, 0
        %s260 = smul.addr %s259, 8
        %s261 = scalar_lea.vmem %s0, %s260
        %p262 = pneg %p51
        %p263 = pneg %p48
        %p264 = pneg %p72
        %p265 = pneg %p69
        %p266 = pneg %p93
        %p267 = pneg %p90
        %p268 = scmp.lt.s32.totalorder %s23, 1
        %s269 = scalar_select %p268, %s23, 1
        %s270 = smul.addr %s269, 8
        %s271 = smul.addr %s270, 4
        %s272 = scalar_lea.vmem %s3, %s271
        %p273 = pneg %p119
        %p274 = pneg %p116
        %p275 = scmp.lt.s32.totalorder %s23, 1
        %s276 = scalar_select %p275, %s23, 1
        %s277 = smul.addr %s276, 4
        %s278 = smul.addr %s277, 4
        %s279 = scalar_lea.vmem %s4, %s278
        %p280 = pneg %p145
        %p281 = pneg %p142
        %p282 = scmp.lt.s32.totalorder %s23, 1
        %s283 = scalar_select %p282, %s23, 1
        %s284 = scalar_lea.vmem %s5, %s283
        %p285 = pneg %p171
        %p286 = pneg %p168
        %p287 = pneg %p197
        %p288 = pneg %p194
        %p289 = scmp.lt.s32.totalorder %s22, 0
        %s290 = scalar_select %p289, %s22, 0
        %s291 = smul.addr %s290, 8
        %s292 = scalar_lea.vmem %s0, %s291
        %p293 = scmp.lt.s32.totalorder %s23, 1
        %s294 = scalar_select %p293, %s23, 1
        %s295 = smul.addr %s294, 8
        %s296 = smul.addr %s295, 4
        %s297 = scalar_lea.vmem %s3, %s296
        %p298 = scmp.lt.s32.totalorder %s23, 1
        %s299 = scalar_select %p298, %s23, 1
        %s300 = smul.addr %s299, 4
        %s301 = smul.addr %s300, 4
        %s302 = scalar_lea.vmem %s4, %s301
        %p303 = scmp.lt.s32.totalorder %s23, 1
        %s304 = scalar_select %p303, %s23, 1
        %s305 = scalar_lea.vmem %s5, %s304
        %p307 = scmp.eq.s32.totalorder %s23, 0
        // Predicated region
        $region45: #{tpu_custom_call.1} parent=43 // pred_check
          %p308 = pneg %p307
        $region46: #{tpu_custom_call.1} parent=43 // pred_check_branch
          %310 = sbr.rel (%p308) target = $region48
        $region47: #{tpu_custom_call.1} parent=43 // pred_region
          %v311 = vld [vmem:[%s292] sm:$0xff]
          %vm312 = vcmask 261120
          %313 = vst.msk [vmem:[#allocation2] sm:$0xff] %vm312, %v311
        $region48: #{tpu_custom_call.1} parent=43 // pred_fallthru
          _
        %v314 = vld [vmem:[#allocation2] sm:$0xff]
        %v315 = vpack.c.bf16 %v314, %v314
        %v316 = vld [vmem:[%s297] sm:$0xf]
        %v317 = vld [vmem:[%s297 + $0x4] sm:$0xf]
        %v318 = vld [vmem:[%s297 + $0x8] sm:$0xf]
        %v319 = vld [vmem:[%s297 + $0xc] sm:$0xf]
        %v324 = vunpack.c.l.b16 %v316
        %v325 = vunpack.c.l.b16 %v317
        %v326 = vunpack.c.l.b16 %v318
        %v327 = vunpack.c.l.b16 %v319
        %v328 = vpack.c.b16 %v325, %v324
        %v329 = vpack.c.b16 %v327, %v326
        %vm332 = vcmask 261120
        %v334 = vsel %vm332, %v315, 0
        %336 = vmatprep.subr.bf16.mxu0 0
        %337 = vmatpush1.bf16.msra.mxu0 %v328
        %338 = vmatprep.subr.bf16.mxu0 0
        %339 = vmatpush1.bf16.msra.mxu0 %v329
        %340 = vmatprep.subr.bf16.mxu0 0
        %341 = vmatpush1.bf16.msra.mxu0 0
        %342 = vmatprep.subr.bf16.mxu0 0
        %343 = vmatpush1.bf16.msra.mxu0 0
        %344 = vmatprep.subr.bf16.mxu0 0
        %345 = vmatpush1.bf16.msra.mxu0 0
        %346 = vmatprep.subr.bf16.mxu0 0
        %347 = vmatpush1.bf16.msra.mxu0 0
        %348 = vmatprep.subr.bf16.mxu0 0
        %349 = vmatpush1.bf16.msra.mxu0 0
        %350 = vmatprep.subr.bf16.mxu0 0
        %351 = vmatpush1.bf16.msra.mxu0 0
        %352 = vmatprep.subr.bf16.mxu0 0
        %353 = vmatpush1.bf16.msra.mxu0 0
        %354 = vmatprep.subr.bf16.mxu0 0
        %355 = vmatpush1.bf16.msra.mxu0 0
        %356 = vmatprep.subr.bf16.mxu0 0
        %357 = vmatpush1.bf16.msra.mxu0 0
        %358 = vmatprep.subr.bf16.mxu0 0
        %359 = vmatpush1.bf16.msra.mxu0 0
        %360 = vmatprep.subr.bf16.mxu0 0
        %361 = vmatpush1.bf16.msra.mxu0 0
        %362 = vmatprep.subr.bf16.mxu0 0
        %363 = vmatpush1.bf16.msra.mxu0 0
        %364 = vmatprep.subr.bf16.mxu0 0
        %365 = vmatpush1.bf16.msra.mxu0 0
        %366 = vmatprep.subr.bf16.mxu0 0
        %367 = vmatpush1.bf16.msra.mxu0 0
        %368 = vmatprep.mubr.bf16.mxu0 0
        %369 = vmatmul.mubr.bf16.gmra.mrb[0].mxu0 %v334
        %v370 = vpop.f32.mrb[0].mxu0
        %v371 = vadd.f32 0.0, %v370
        %v372 = vpop.f32.mrb[0].mxu0
        %v373 = vpop.f32.mrb[0].mxu0
        %v374 = vpop.f32.mrb[0].mxu0
        %375 = vdwg.mxu0
        %v376 = vpack.c.bf16 %v371, %v371
        %v377 = vld [vmem:[%s1] sm:$0xf]
        %v378 = vld [vmem:[%s1 + $0x4] sm:$0xf]
        %v381 = vunpack.c.l.b16 %v377
        %v382 = vunpack.c.l.b16 %v378
        %v383 = vpack.c.b16 %v382, %v381
        %vm385 = vcmask 130048
        %v387 = vsel %vm385, %v376, 0
        %389 = vmatprep.subr.bf16.mxu0 0
        %390 = vmatpush1.bf16.msra.mxu0 %v383
        %391 = vmatprep.subr.bf16.mxu0 0
        %392 = vmatpush1.bf16.msra.mxu0 0
        %393 = vmatprep.subr.bf16.mxu0 0
        %394 = vmatpush1.bf16.msra.mxu0 0
        %395 = vmatprep.subr.bf16.mxu0 0
        %396 = vmatpush1.bf16.msra.mxu0 0
        %397 = vmatprep.subr.bf16.mxu0 0
        %398 = vmatpush1.bf16.msra.mxu0 0
        %399 = vmatprep.subr.bf16.mxu0 0
        %400 = vmatpush1.bf16.msra.mxu0 0
        %401 = vmatprep.subr.bf16.mxu0 0
        %402 = vmatpush1.bf16.msra.mxu0 0
        %403 = vmatprep.subr.bf16.mxu0 0
        %404 = vmatpush1.bf16.msra.mxu0 0
        %405 = vmatprep.subr.bf16.mxu0 0
        %406 = vmatpush1.bf16.msra.mxu0 0
        %407 = vmatprep.subr.bf16.mxu0 0
        %408 = vmatpush1.bf16.msra.mxu0 0
        %409 = vmatprep.subr.bf16.mxu0 0
        %410 = vmatpush1.bf16.msra.mxu0 0
        %411 = vmatprep.subr.bf16.mxu0 0
        %412 = vmatpush1.bf16.msra.mxu0 0
        %413 = vmatprep.subr.bf16.mxu0 0
        %414 = vmatpush1.bf16.msra.mxu0 0
        %415 = vmatprep.subr.bf16.mxu0 0
        %416 = vmatpush1.bf16.msra.mxu0 0
        %417 = vmatprep.subr.bf16.mxu0 0
        %418 = vmatpush1.bf16.msra.mxu0 0
        %419 = vmatprep.subr.bf16.mxu0 0
        %420 = vmatpush1.bf16.msra.mxu0 0
        %421 = vmatprep.mubr.bf16.mxu0 0
        %422 = vmatmul.mubr.bf16.gmra.mrb[0].mxu0 %v387
        %v423 = vpop.f32.mrb[0].mxu0
        %v424 = vadd.f32 0.0, %v423
        %v425 = vpop.f32.mrb[0].mxu0
        %v426 = vpop.f32.mrb[0].mxu0
        %v427 = vpop.f32.mrb[0].mxu0
        %428 = vdwg.mxu0
        %v429 = vsel %vm385, %v424, -inf
        %430 = vmax.xlane.f32.xlu0 %v429
        %v431 = vpop.xlane.xlu0 %430
        %v432 = vsub.f32 %v424, %v431
        %v433 = vmul.f32 %v432, 1.442695
        %v434 = vpow.pop %v433
        %v435 = vsel %vm385, %v434, 0.0
        %436 = vadd.xlane.f32.xlu0 %v435
        %v437 = vpop.xlane.xlu0 %436
        %v438 = vrcp.pop %v437
        %v439 = vmul.f32 %v434, %v438
        %v440 = vpack.c.bf16 %v439, %v439
        %v441 = vld [vmem:[%s2] sm:$0xf]
        %v442 = vld [vmem:[%s2 + $0x4] sm:$0xf]
        %v445 = vunpack.c.l.b16 %v441
        %v446 = vunpack.c.l.b16 %v442
        %v447 = vpack.c.b16 %v446, %v445
        %v450 = vsel %vm385, %v440, 0
        %452 = vmatprep.subr.bf16.mxu0 0
        %453 = vmatpush1.bf16.msra.mxu0 %v447
        %454 = vmatprep.subr.bf16.mxu0 0
        %455 = vmatpush1.bf16.msra.mxu0 0
        %456 = vmatprep.subr.bf16.mxu0 0
        %457 = vmatpush1.bf16.msra.mxu0 0
        %458 = vmatprep.subr.bf16.mxu0 0
        %459 = vmatpush1.bf16.msra.mxu0 0
        %460 = vmatprep.subr.bf16.mxu0 0
        %461 = vmatpush1.bf16.msra.mxu0 0
        %462 = vmatprep.subr.bf16.mxu0 0
        %463 = vmatpush1.bf16.msra.mxu0 0
        %464 = vmatprep.subr.bf16.mxu0 0
        %465 = vmatpush1.bf16.msra.mxu0 0
        %466 = vmatprep.subr.bf16.mxu0 0
        %467 = vmatpush1.bf16.msra.mxu0 0
        %468 = vmatprep.subr.bf16.mxu0 0
        %469 = vmatpush1.bf16.msra.mxu0 0
        %470 = vmatprep.subr.bf16.mxu0 0
        %471 = vmatpush1.bf16.msra.mxu0 0
        %472 = vmatprep.subr.bf16.mxu0 0
        %473 = vmatpush1.bf16.msra.mxu0 0
        %474 = vmatprep.subr.bf16.mxu0 0
        %475 = vmatpush1.bf16.msra.mxu0 0
        %476 = vmatprep.subr.bf16.mxu0 0
        %477 = vmatpush1.bf16.msra.mxu0 0
        %478 = vmatprep.subr.bf16.mxu0 0
        %479 = vmatpush1.bf16.msra.mxu0 0
        %480 = vmatprep.subr.bf16.mxu0 0
        %481 = vmatpush1.bf16.msra.mxu0 0
        %482 = vmatprep.subr.bf16.mxu0 0
        %483 = vmatpush1.bf16.msra.mxu0 0
        %484 = vmatprep.mubr.bf16.mxu0 0
        %485 = vmatmul.mubr.bf16.gmra.mrb[0].mxu0 %v450
        %v486 = vpop.f32.mrb[0].mxu0
        %v487 = vadd.f32 0.0, %v486
        %v488 = vpop.f32.mrb[0].mxu0
        %v489 = vpop.f32.mrb[0].mxu0
        %v490 = vpop.f32.mrb[0].mxu0
        %491 = vdwg.mxu0
        %v492 = vpack.c.bf16 %v487, %v487
        %v493 = vld [vmem:[%s302] sm:$0xf]
        %v494 = vld [vmem:[%s302 + $0x4] sm:$0xf]
        %s495 = scalar_lea.vmem %s297, 16
        %v496 = vld [vmem:[%s495] sm:$0xf]
        %v497 = vld [vmem:[%s495 + $0x4] sm:$0xf]
        %v498 = vld [vmem:[%s495 + $0x8] sm:$0xf]
        %v499 = vld [vmem:[%s495 + $0xc] sm:$0xf]
        %v504 = vunpack.c.l.b16 %v496
        %v505 = vunpack.c.l.b16 %v497
        %v506 = vunpack.c.l.b16 %v498
        %v507 = vunpack.c.l.b16 %v499
        %v508 = vpack.c.b16 %v505, %v504
        %v509 = vpack.c.b16 %v507, %v506
        %512 = vmatprep.subr.bf16.mxu0 0
        %513 = vmatpush1.bf16.msra.mxu0 %v508
        %514 = vmatprep.subr.bf16.mxu0 0
        %515 = vmatpush1.bf16.msra.mxu0 %v509
        %516 = vmatprep.subr.bf16.mxu0 0
        %517 = vmatpush1.bf16.msra.mxu0 0
        %518 = vmatprep.subr.bf16.mxu0 0
        %519 = vmatpush1.bf16.msra.mxu0 0
        %520 = vmatprep.subr.bf16.mxu0 0
        %521 = vmatpush1.bf16.msra.mxu0 0
        %522 = vmatprep.subr.bf16.mxu0 0
        %523 = vmatpush1.bf16.msra.mxu0 0
        %524 = vmatprep.subr.bf16.mxu0 0
        %525 = vmatpush1.bf16.msra.mxu0 0
        %526 = vmatprep.subr.bf16.mxu0 0
        %527 = vmatpush1.bf16.msra.mxu0 0
        %528 = vmatprep.subr.bf16.mxu0 0
        %529 = vmatpush1.bf16.msra.mxu0 0
        %530 = vmatprep.subr.bf16.mxu0 0
        %531 = vmatpush1.bf16.msra.mxu0 0
        %532 = vmatprep.subr.bf16.mxu0 0
        %533 = vmatpush1.bf16.msra.mxu0 0
        %534 = vmatprep.subr.bf16.mxu0 0
        %535 = vmatpush1.bf16.msra.mxu0 0
        %536 = vmatprep.subr.bf16.mxu0 0
        %537 = vmatpush1.bf16.msra.mxu0 0
        %538 = vmatprep.subr.bf16.mxu0 0
        %539 = vmatpush1.bf16.msra.mxu0 0
        %540 = vmatprep.subr.bf16.mxu0 0
        %541 = vmatpush1.bf16.msra.mxu0 0
        %542 = vmatprep.subr.bf16.mxu0 0
        %543 = vmatpush1.bf16.msra.mxu0 0
        %544 = vmatprep.mubr.bf16.mxu0 0
        %545 = vmatmul.mubr.bf16.gmra.mrb[0].mxu0 %v334
        %v546 = vpop.f32.mrb[0].mxu0
        %v547 = vadd.f32 0.0, %v546
        %v548 = vpop.f32.mrb[0].mxu0
        %v549 = vpop.f32.mrb[0].mxu0
        %v550 = vpop.f32.mrb[0].mxu0
        %551 = vdwg.mxu0
        %v552 = vpack.c.bf16 %v547, %v547
        %s553 = scalar_lea.vmem %s1, 8
        %v554 = vld [vmem:[%s553] sm:$0xf]
        %v555 = vld [vmem:[%s553 + $0x4] sm:$0xf]
        %v558 = vunpack.c.l.b16 %v554
        %v559 = vunpack.c.l.b16 %v555
        %v560 = vpack.c.b16 %v559, %v558
        %v563 = vsel %vm385, %v552, 0
        %565 = vmatprep.subr.bf16.mxu0 0
        %566 = vmatpush1.bf16.msra.mxu0 %v560
        %567 = vmatprep.subr.bf16.mxu0 0
        %568 = vmatpush1.bf16.msra.mxu0 0
        %569 = vmatprep.subr.bf16.mxu0 0
        %570 = vmatpush1.bf16.msra.mxu0 0
        %571 = vmatprep.subr.bf16.mxu0 0
        %572 = vmatpush1.bf16.msra.mxu0 0
        %573 = vmatprep.subr.bf16.mxu0 0
        %574 = vmatpush1.bf16.msra.mxu0 0
        %575 = vmatprep.subr.bf16.mxu0 0
        %576 = vmatpush1.bf16.msra.mxu0 0
        %577 = vmatprep.subr.bf16.mxu0 0
        %578 = vmatpush1.bf16.msra.mxu0 0
        %579 = vmatprep.subr.bf16.mxu0 0
        %580 = vmatpush1.bf16.msra.mxu0 0
        %581 = vmatprep.subr.bf16.mxu0 0
        %582 = vmatpush1.bf16.msra.mxu0 0
        %583 = vmatprep.subr.bf16.mxu0 0
        %584 = vmatpush1.bf16.msra.mxu0 0
        %585 = vmatprep.subr.bf16.mxu0 0
        %586 = vmatpush1.bf16.msra.mxu0 0
        %587 = vmatprep.subr.bf16.mxu0 0
        %588 = vmatpush1.bf16.msra.mxu0 0
        %589 = vmatprep.subr.bf16.mxu0 0
        %590 = vmatpush1.bf16.msra.mxu0 0
        %591 = vmatprep.subr.bf16.mxu0 0
        %592 = vmatpush1.bf16.msra.mxu0 0
        %593 = vmatprep.subr.bf16.mxu0 0
        %594 = vmatpush1.bf16.msra.mxu0 0
        %595 = vmatprep.subr.bf16.mxu0 0
        %596 = vmatpush1.bf16.msra.mxu0 0
        %597 = vmatprep.mubr.bf16.mxu0 0
        %598 = vmatmul.mubr.bf16.gmra.mrb[0].mxu0 %v563
        %v599 = vpop.f32.mrb[0].mxu0
        %v600 = vadd.f32 0.0, %v599
        %v601 = vpop.f32.mrb[0].mxu0
        %v602 = vpop.f32.mrb[0].mxu0
        %v603 = vpop.f32.mrb[0].mxu0
        %604 = vdwg.mxu0
        %v605 = vsel %vm385, %v600, -inf
        %606 = vmax.xlane.f32.xlu0 %v605
        %v607 = vpop.xlane.xlu0 %606
        %v608 = vsub.f32 %v600, %v607
        %v609 = vmul.f32 %v608, 1.442695
        %v610 = vpow.pop %v609
        %v611 = vsel %vm385, %v610, 0.0
        %612 = vadd.xlane.f32.xlu0 %v611
        %v613 = vpop.xlane.xlu0 %612
        %v614 = vrcp.pop %v613
        %v615 = vmul.f32 %v610, %v614
        %v616 = vpack.c.bf16 %v615, %v615
        %s617 = scalar_lea.vmem %s2, 8
        %v618 = vld [vmem:[%s617] sm:$0xf]
        %v619 = vld [vmem:[%s617 + $0x4] sm:$0xf]
        %v622 = vunpack.c.l.b16 %v618
        %v623 = vunpack.c.l.b16 %v619
        %v624 = vpack.c.b16 %v623, %v622
        %v627 = vsel %vm385, %v616, 0
        %629 = vmatprep.subr.bf16.mxu0 0
        %630 = vmatpush1.bf16.msra.mxu0 %v624
        %631 = vmatprep.subr.bf16.mxu0 0
        %632 = vmatpush1.bf16.msra.mxu0 0
        %633 = vmatprep.subr.bf16.mxu0 0
        %634 = vmatpush1.bf16.msra.mxu0 0
        %635 = vmatprep.subr.bf16.mxu0 0
        %636 = vmatpush1.bf16.msra.mxu0 0
        %637 = vmatprep.subr.bf16.mxu0 0
        %638 = vmatpush1.bf16.msra.mxu0 0
        %639 = vmatprep.subr.bf16.mxu0 0
        %640 = vmatpush1.bf16.msra.mxu0 0
        %641 = vmatprep.subr.bf16.mxu0 0
        %642 = vmatpush1.bf16.msra.mxu0 0
        %643 = vmatprep.subr.bf16.mxu0 0
        %644 = vmatpush1.bf16.msra.mxu0 0
        %645 = vmatprep.subr.bf16.mxu0 0
        %646 = vmatpush1.bf16.msra.mxu0 0
        %647 = vmatprep.subr.bf16.mxu0 0
        %648 = vmatpush1.bf16.msra.mxu0 0
        %649 = vmatprep.subr.bf16.mxu0 0
        %650 = vmatpush1.bf16.msra.mxu0 0
        %651 = vmatprep.subr.bf16.mxu0 0
        %652 = vmatpush1.bf16.msra.mxu0 0
        %653 = vmatprep.subr.bf16.mxu0 0
        %654 = vmatpush1.bf16.msra.mxu0 0
        %655 = vmatprep.subr.bf16.mxu0 0
        %656 = vmatpush1.bf16.msra.mxu0 0
        %657 = vmatprep.subr.bf16.mxu0 0
        %658 = vmatpush1.bf16.msra.mxu0 0
        %659 = vmatprep.subr.bf16.mxu0 0
        %660 = vmatpush1.bf16.msra.mxu0 0
        %661 = vmatprep.mubr.bf16.mxu0 0
        %662 = vmatmul.mubr.bf16.gmra.mrb[0].mxu0 %v627
        %v663 = vpop.f32.mrb[0].mxu0
        %v664 = vadd.f32 0.0, %v663
        %v665 = vpop.f32.mrb[0].mxu0
        %v666 = vpop.f32.mrb[0].mxu0
        %v667 = vpop.f32.mrb[0].mxu0
        %668 = vdwg.mxu0
        %v669 = vpack.c.bf16 %v664, %v664
        %s670 = scalar_lea.vmem %s302, 8
        %v671 = vld [vmem:[%s670] sm:$0xf]
        %v672 = vld [vmem:[%s670 + $0x4] sm:$0xf]
        %v675 = vunpack.c.l.b16 %v671
        %v676 = vunpack.c.l.b16 %v672
        %v677 = vpack.c.b16 %v676, %v675
        %v680 = vsel %vm385, %v669, 0
        %682 = vmatprep.subr.bf16.mxu0 0
        %683 = vmatpush1.bf16.msra.mxu0 %v677
        %684 = vmatprep.subr.bf16.mxu0 0
        %685 = vmatpush1.bf16.msra.mxu0 0
        %686 = vmatprep.subr.bf16.mxu0 0
        %687 = vmatpush1.bf16.msra.mxu0 0
        %688 = vmatprep.subr.bf16.mxu0 0
        %689 = vmatpush1.bf16.msra.mxu0 0
        %690 = vmatprep.subr.bf16.mxu0 0
        %691 = vmatpush1.bf16.msra.mxu0 0
        %692 = vmatprep.subr.bf16.mxu0 0
        %693 = vmatpush1.bf16.msra.mxu0 0
        %694 = vmatprep.subr.bf16.mxu0 0
        %695 = vmatpush1.bf16.msra.mxu0 0
        %696 = vmatprep.subr.bf16.mxu0 0
        %697 = vmatpush1.bf16.msra.mxu0 0
        %698 = vmatprep.subr.bf16.mxu0 0
        %699 = vmatpush1.bf16.msra.mxu0 0
        %700 = vmatprep.subr.bf16.mxu0 0
        %701 = vmatpush1.bf16.msra.mxu0 0
        %702 = vmatprep.subr.bf16.mxu0 0
        %703 = vmatpush1.bf16.msra.mxu0 0
        %704 = vmatprep.subr.bf16.mxu0 0
        %705 = vmatpush1.bf16.msra.mxu0 0
        %706 = vmatprep.subr.bf16.mxu0 0
        %707 = vmatpush1.bf16.msra.mxu0 0
        %708 = vmatprep.subr.bf16.mxu0 0
        %709 = vmatpush1.bf16.msra.mxu0 0
        %710 = vmatprep.subr.bf16.mxu0 0
        %711 = vmatpush1.bf16.msra.mxu0 0
        %712 = vmatprep.subr.bf16.mxu0 0
        %713 = vmatpush1.bf16.msra.mxu0 0
        %714 = vmatprep.mubr.bf16.mxu0 0
        %715 = vmatmul.mubr.bf16.gmra.mrb[0].mxu0 %v680
        %v716 = vpop.f32.mrb[0].mxu0
        %v717 = vadd.f32 0.0, %v716
        %v718 = vpop.f32.mrb[0].mxu0
        %v719 = vpop.f32.mrb[0].mxu0
        %v720 = vpop.f32.mrb[0].mxu0
        %721 = vdwg.mxu0
        %v724 = vunpack.c.l.b16 %v493
        %v725 = vunpack.c.l.b16 %v494
        %v726 = vpack.c.b16 %v725, %v724
        %v729 = vsel %vm385, %v492, 0
        %731 = vmatprep.subr.bf16.mxu0 0
        %732 = vmatpush1.bf16.msra.mxu0 %v726
        %733 = vmatprep.subr.bf16.mxu0 0
        %734 = vmatpush1.bf16.msra.mxu0 0
        %735 = vmatprep.subr.bf16.mxu0 0
        %736 = vmatpush1.bf16.msra.mxu0 0
        %737 = vmatprep.subr.bf16.mxu0 0
        %738 = vmatpush1.bf16.msra.mxu0 0
        %739 = vmatprep.subr.bf16.mxu0 0
        %740 = vmatpush1.bf16.msra.mxu0 0
        %741 = vmatprep.subr.bf16.mxu0 0
        %742 = vmatpush1.bf16.msra.mxu0 0
        %743 = vmatprep.subr.bf16.mxu0 0
        %744 = vmatpush1.bf16.msra.mxu0 0
        %745 = vmatprep.subr.bf16.mxu0 0
        %746 = vmatpush1.bf16.msra.mxu0 0
        %747 = vmatprep.subr.bf16.mxu0 0
        %748 = vmatpush1.bf16.msra.mxu0 0
        %749 = vmatprep.subr.bf16.mxu0 0
        %750 = vmatpush1.bf16.msra.mxu0 0
        %751 = vmatprep.subr.bf16.mxu0 0
        %752 = vmatpush1.bf16.msra.mxu0 0
        %753 = vmatprep.subr.bf16.mxu0 0
        %754 = vmatpush1.bf16.msra.mxu0 0
        %755 = vmatprep.subr.bf16.mxu0 0
        %756 = vmatpush1.bf16.msra.mxu0 0
        %757 = vmatprep.subr.bf16.mxu0 0
        %758 = vmatpush1.bf16.msra.mxu0 0
        %759 = vmatprep.subr.bf16.mxu0 0
        %760 = vmatpush1.bf16.msra.mxu0 0
        %761 = vmatprep.subr.bf16.mxu0 0
        %762 = vmatpush1.bf16.msra.mxu0 0
        %763 = vmatprep.mubr.bf16.mxu0 0
        %764 = vmatmul.mubr.bf16.gmra.mrb[0].mxu0 %v729
        %v765 = vpop.f32.mrb[0].mxu0
        %v766 = vadd.f32 %v717, %v765
        %v767 = vpop.f32.mrb[0].mxu0
        %v768 = vpop.f32.mrb[0].mxu0
        %v769 = vpop.f32.mrb[0].mxu0
        %770 = vdwg.mxu0
        %v771 = vld [vmem:[%s305] sm:$0x1]
        %v773 = vlaneseq
        %v774 = vshrl.u32 %v773, 7
        %v775 = vsub.s32 0, %v774
        %v776 = vrot.slane %v771, %v775
        %v778 = vadd.f32 %v766, %v776
        %v779 = vadd.f32 %v778, %v314
        %v780 = vsel %vm332, %v779, 0.0
        %781 = vadd.xlane.f32.xlu0 %v780
        %v782 = vpop.xlane.xlu0 %781
        %v783 = vrcp.pop 32.0
        %v784 = vmul.f32 %v782, %v783
        %v785 = vmul.f32 %v779, %v779
        %v786 = vsel %vm332, %v785, 0.0
        %787 = vadd.xlane.f32.xlu0 %v786
        %v788 = vpop.xlane.xlu0 %787
        %v789 = vmul.f32 %v788, %v783
        %v790 = vmul.f32 %v784, %v784
        %v791 = vsub.f32 %v789, %v790
        %v792 = vsub.f32 %v779, %v784
        %v793 = vadd.f32 %v791, 1e-05
        %v794 = vrsqrt.pop %v793
        %v795 = vmul.f32 %v792, %v794
        %796 = vst.msk [vmem:[#allocation2] sm:$0xff] %vm332, %v795
        %p797 = scmp.eq.s32.totalorder %s23, 1
        // Predicated region
        $region49: #{tpu_custom_call.1} parent=43 // pred_check
          %p798 = pneg %p797
        $region50: #{tpu_custom_call.1} parent=43 // pred_check_branch
          %800 = sbr.rel (%p798) target = $region52
        $region51: #{tpu_custom_call.1} parent=43 // pred_region
          %v801 = vld [vmem:[#allocation2] sm:$0xff]
          %802 = vst.msk [vmem:[#allocation3] sm:$0xff] %vm332, %v801
        $region52: #{tpu_custom_call.1} parent=43 // pred_fallthru
          _
        // Predicated region
        $region53: #{tpu_custom_call.1} parent=43 // pred_check
          %p803 = pneg %p194
        $region54: #{tpu_custom_call.1} parent=43 // pred_check_branch
          %805 = sbr.rel (%p803) target = $region56
        $region55: #{tpu_custom_call.1} parent=43 // pred_region
          %s807 = ssub.s32 128, 128
          %808 = vsyncadd [#allocation4], %s807
          %s809 = smul.addr %s22, 128
          %s810 = scalar_lea.hbm %s6, %s809
          %s812 = sshll.u32 [#allocation3], 4
          %s813 = int_to_ptr.vmem [resolvable:$true] %s812
          %815 = dma.vmem_to_hbm [thread:$0]  %s813, 128, %s810, [#allocation4]
        $region56: #{tpu_custom_call.1} parent=43 // pred_fallthru
          _
        // Predicated region
        $region57: #{tpu_custom_call.1} parent=43 // pred_check
          %p816 = pneg %p194
        $region58: #{tpu_custom_call.1} parent=43 // pred_check_branch
          %818 = sbr.rel (%p816) target = $region60
        $region59: #{tpu_custom_call.1} parent=43 // pred_region
          %819 = dma.done [#allocation4], 128
        $region60: #{tpu_custom_call.1} parent=43 // pred_fallthru
          _
      $region44: #{tpu_custom_call.1} parent=5 // pred_fallthru
        _
      %p820 = scmp.le.s32.totalorder 2, %s13
      // Predicated region
      $region61: #{tpu_custom_call.1} parent=5 // pred_check
        %p821 = pneg %p820
      $region62: #{tpu_custom_call.1} parent=5 // pred_check_branch
        %823 = sbr.rel (%p821) target = $region64
      $region63: #{tpu_custom_call.1} parent=5 // pred_region
        %s824 = ssub.s32 %s13, 2
      $region64: #{tpu_custom_call.1} parent=5 // pred_fallthru
        _
    $region6: #{tpu_custom_call.1} parent=1 // loop_footer
      %s17 = sadd.s32 1, %s13
    $region7: #{tpu_custom_call.1} parent=1 // loop_footer_branch
      %12 = sbr.rel target = $region3
    $region8: #{tpu_custom_call.1} parent=1 // loop_exit
      _
    %825 = vsyncpa [#allocation4], 1
    %s826 = scalar_lea.sflag [#allocation4], 1
    %827 = vsyncpa %s826, 1

</llo_original>
